<compile_context>
chip_gen: v6e
topology: v6e:2x2x1
jax: 0.10.0
libtpu: 0.0.40
codegen_flags: <defaults>
</compile_context>

<pallas_src>
import functools

import numpy as np
import jax
import jax.numpy as jnp
from jax import lax
from jax.experimental import pallas as pl
from jax.experimental.pallas import tpu as pltpu

EPS = 1e-5
MXU_DTYPE = jnp.bfloat16   # conv matmul operand dtype (accumulation stays f32)


def _bilinear_matrix(n_in, n_out):
    """Dense 1-D bilinear interpolation matrix, align_corners=True
    (semantics of nn.UpsamplingBilinear2d)."""
    u = np.zeros((n_out, n_in), dtype=np.float32)
    if n_out == 1 or n_in == 1:
        u[:, 0] = 1.0
        return u
    scale = (n_in - 1) / (n_out - 1)
    for i in range(n_out):
        s = i * scale
        i0 = int(np.floor(s))
        i1 = min(i0 + 1, n_in - 1)
        f = s - i0
        u[i, i0] += 1.0 - f
        u[i, i1] += f
    return u


# ----------------------------------------------------------------------------
# in-kernel helpers (operate on lane-dense (C, H*W) tiles)
# ----------------------------------------------------------------------------
def _tap(xf, dy, dx, w2, mask_l, mask_r):
    """Lane-shifted copy of xf (rows=channels, cols=flattened H*W) for the
    3x3 conv tap (dy, dx), zero-filled at the image border."""
    r, n = xf.shape
    d = dy * w2 + dx
    if d > 0:
        s = jnp.concatenate([xf[:, d:], jnp.zeros((r, d), xf.dtype)], axis=1)
    elif d < 0:
        s = jnp.concatenate([jnp.zeros((r, -d), xf.dtype), xf[:, :n + d]], axis=1)
    else:
        s = xf
    if dx == 1:
        s = s * mask_r
    elif dx == -1:
        s = s * mask_l
    return s


def _im2col(xf, w2, mask_l, mask_r):
    """(Cin, HW) -> (9*Cin, HW) patch matrix for a 3x3 'same' convolution."""
    taps = [_tap(xf, t // 3 - 1, t % 3 - 1, w2, mask_l, mask_r) for t in range(9)]
    return jnp.concatenate(taps, axis=0)


def _channel_stats(y):
    """(C, HW) f32 -> (C, 2) [sum, sum-of-squares] over the spatial axis."""
    return jnp.concatenate([jnp.sum(y, axis=1, keepdims=True),
                            jnp.sum(y * y, axis=1, keepdims=True)], axis=1)


# ----------------------------------------------------------------------------
# pass 1: bilinear upsample + channel concat + conv1 (+ BN1 partial stats)
# ----------------------------------------------------------------------------
def _up_conv1_kernel(x1_ref, x2_ref, uwT_ref, uh_ref, w1_ref, cm_ref,
                     act_ref, st_ref, *, W2):
    C1, H1, W1 = x1_ref.shape[1:]
    H2 = uh_ref.shape[0]
    HW = x2_ref.shape[2]

    # separable bilinear 2x upsample (align_corners=True): W then H
    tw = jnp.dot(x1_ref[0].reshape(C1 * H1, W1), uwT_ref[...],
                 preferred_element_type=jnp.float32)              # (C1*H1, W2)
    tw = tw.reshape(C1, H1, W2)
    uhb = jnp.broadcast_to(uh_ref[...], (C1, H2, H1))
    up = lax.dot_general(uhb, tw, (((2,), (1,)), ((0,), (0,))),
                         preferred_element_type=jnp.float32)      # (C1, H2, W2)
    up = up.reshape(C1, HW)

    # concat([up(x1), x2], channel) in lane-dense layout
    xcat = jnp.concatenate([up, x2_ref[0]], axis=0).astype(MXU_DTYPE)

    # single MXU matmul over the im2col patch matrix (K = 9 * 2 * C1)
    mask_l = cm_ref[0:1, :]
    mask_r = cm_ref[1:2, :]
    patches = _im2col(xcat, W2, mask_l, mask_r)                   # (9*2*C1, HW)
    y = jnp.dot(w1_ref[...], patches, preferred_element_type=jnp.float32)

    act_ref[0] = y
    st_ref[0] = _channel_stats(y)


# ----------------------------------------------------------------------------
# pass 2: BN1 + ReLU + conv2 (+ BN2 partial stats)
# ----------------------------------------------------------------------------
def _bn_conv2_kernel(a_ref, m_ref, v_ref, g_ref, b_ref, w2_ref, cm_ref,
                     act_ref, st_ref, *, W2):
    a = a_ref[0]                                                   # (Cmid, HW)
    h = jnp.maximum((a - m_ref[...]) * lax.rsqrt(v_ref[...] + EPS) * g_ref[...]
                    + b_ref[...], 0.0)

    mask_l = cm_ref[0:1, :]
    mask_r = cm_ref[1:2, :]
    patches = _im2col(h.astype(MXU_DTYPE), W2, mask_l, mask_r)     # (9*Cmid, HW)
    y = jnp.dot(w2_ref[...], patches, preferred_element_type=jnp.float32)

    act_ref[0] = y
    st_ref[0] = _channel_stats(y)


# ----------------------------------------------------------------------------
# pass 3: BN2 + ReLU
# ----------------------------------------------------------------------------
def _bn_relu_kernel(a_ref, m_ref, v_ref, g_ref, b_ref, o_ref):
    a = a_ref[0]
    o_ref[0] = jnp.maximum((a - m_ref[...]) * lax.rsqrt(v_ref[...] + EPS)
                           * g_ref[...] + b_ref[...], 0.0)


# ----------------------------------------------------------------------------
# wrapper
# ----------------------------------------------------------------------------
def up_forward(x1_nchw, x2_nchw, params):
    """Up.forward(x1, x2) — NCHW in / NCHW out, like PyTorch (training-mode BN)."""
    w1, w2, g1, b1, g2, b2 = params
    B, C1, H1, W1 = x1_nchw.shape
    _, C1b, H2, W2 = x2_nchw.shape
    assert H2 == 2 * H1 and W2 == 2 * W1
    Cin = C1 + C1b
    Cmid = w1.shape[0]
    Cout = w2.shape[0]
    HW = H2 * W2
    n = B * HW

    # small constant operands ------------------------------------------------
    uh = jnp.asarray(_bilinear_matrix(H1, H2))           # (H2, H1)
    uwT = jnp.asarray(_bilinear_matrix(W1, W2).T)        # (W1, W2)
    xs = np.arange(HW) % W2
    colmask = jnp.asarray(np.stack([(xs >= 1), (xs <= W2 - 2)]).astype(np.float32),
                          dtype=MXU_DTYPE)               # (2, HW): dx=-1, dx=+1 masks

    # conv weights: torch (O, I, 3, 3) -> (O, 9*I), tap-major rows matching im2col
    w1mat = jnp.transpose(w1, (0, 2, 3, 1)).reshape(Cmid, 9 * Cin).astype(MXU_DTYPE)
    w2mat = jnp.transpose(w2, (0, 2, 3, 1)).reshape(Cout, 9 * Cmid).astype(MXU_DTYPE)

    x2f = x2_nchw.reshape(B, C1b, HW)                    # lane-dense skip branch

    parallel = pltpu.CompilerParams(dimension_semantics=("parallel",))

    def full(shape):
        return pl.BlockSpec(shape, lambda b, _s=shape: (0,) * len(_s))

    # ---- pass 1: upsample + concat + conv1, per-image BN1 partials ----------
    act1, st1 = pl.pallas_call(
        functools.partial(_up_conv1_kernel, W2=W2),
        grid=(B,),
        in_specs=[
            pl.BlockSpec((1, C1, H1, W1), lambda b: (b, 0, 0, 0)),
            pl.BlockSpec((1, C1b, HW), lambda b: (b, 0, 0)),
            full((W1, W2)),
            full((H2, H1)),
            full((Cmid, 9 * Cin)),
            full((2, HW)),
        ],
        out_specs=(
            pl.BlockSpec((1, Cmid, HW), lambda b: (b, 0, 0)),
            pl.BlockSpec((1, Cmid, 2), lambda b: (b, 0, 0)),
        ),
        out_shape=(
            jax.ShapeDtypeStruct((B, Cmid, HW), jnp.float32),
            jax.ShapeDtypeStruct((B, Cmid, 2), jnp.float32),
        ),
        compiler_params=parallel,
    )(x1_nchw, x2f, uwT, uh, w1mat, colmask)

    s1 = jnp.sum(st1, axis=0)                            # (Cmid, 2)
    mean1 = (s1[:, 0] / n).reshape(Cmid, 1)
    var1 = (s1[:, 1] / n).reshape(Cmid, 1) - mean1 * mean1

    # ---- pass 2: BN1 + ReLU + conv2, per-image BN2 partials ------------------
    act2, st2 = pl.pallas_call(
        functools.partial(_bn_conv2_kernel, W2=W2),
        grid=(B,),
        in_specs=[
            pl.BlockSpec((1, Cmid, HW), lambda b: (b, 0, 0)),
            full((Cmid, 1)), full((Cmid, 1)), full((Cmid, 1)), full((Cmid, 1)),
            full((Cout, 9 * Cmid)),
            full((2, HW)),
        ],
        out_specs=(
            pl.BlockSpec((1, Cout, HW), lambda b: (b, 0, 0)),
            pl.BlockSpec((1, Cout, 2), lambda b: (b, 0, 0)),
        ),
        out_shape=(
            jax.ShapeDtypeStruct((B, Cout, HW), jnp.float32),
            jax.ShapeDtypeStruct((B, Cout, 2), jnp.float32),
        ),
        compiler_params=parallel,
    )(act1, mean1, var1, g1.reshape(Cmid, 1), b1.reshape(Cmid, 1), w2mat, colmask)

    s2 = jnp.sum(st2, axis=0)                            # (Cout, 2)
    mean2 = (s2[:, 0] / n).reshape(Cout, 1)
    var2 = (s2[:, 1] / n).reshape(Cout, 1) - mean2 * mean2

    # ---- pass 3: BN2 + ReLU ---------------------------------------------------
    out = pl.pallas_call(
        _bn_relu_kernel,
        grid=(B,),
        in_specs=[
            pl.BlockSpec((1, Cout, HW), lambda b: (b, 0, 0)),
            full((Cout, 1)), full((Cout, 1)), full((Cout, 1)), full((Cout, 1)),
        ],
        out_specs=pl.BlockSpec((1, Cout, HW), lambda b: (b, 0, 0)),
        out_shape=jax.ShapeDtypeStruct((B, Cout, HW), jnp.float32),
        compiler_params=parallel,
    )(act2, mean2, var2, g2.reshape(Cout, 1), b2.reshape(Cout, 1))

    # lane-dense output is already NCHW-flat: reshape only, no transpose
    return out.reshape(B, Cout, H2, W2)


# ----------------------------------------------------------------------------
# pure-JAX reference for validation
# ----------------------------------------------------------------------------
def _reference(x1_nchw, x2_nchw, params):
    w1, w2, g1, b1, g2, b2 = params
    B, C1, H1, W1 = x1_nchw.shape
    H2, W2 = 2 * H1, 2 * W1
    uh = jnp.asarray(_bilinear_matrix(H1, H2))
    uw = jnp.asarray(_bilinear_matrix(W1, W2))
    x1 = jnp.transpose(x1_nchw, (0, 2, 3, 1))
    x2 = jnp.transpose(x2_nchw, (0, 2, 3, 1))
    up = jnp.einsum('ih,bhwc->biwc', uh, x1, precision=lax.Precision.HIGHEST)
    up = jnp.einsum('jw,biwc->bijc', uw, up, precision=lax.Precision.HIGHEST)
    x = jnp.concatenate([up, x2], axis=-1)

    def conv(x, w_oihw):
        w = jnp.transpose(w_oihw, (2, 3, 1, 0))
        return lax.conv_general_dilated(
            x, w, (1, 1), 'SAME',
            dimension_numbers=('NHWC', 'HWIO', 'NHWC'),
            precision=lax.Precision.HIGHEST)

    def bn_relu(x, g, b):
        m = jnp.mean(x, axis=(0, 1, 2), keepdims=True)
        v = jnp.mean((x - m) ** 2, axis=(0, 1, 2), keepdims=True)
        return jnp.maximum((x - m) * lax.rsqrt(v + EPS) * g + b, 0.0)

    x = bn_relu(conv(x, w1), g1, b1)
    x = bn_relu(conv(x, w2), g2, b2)
    return jnp.transpose(x, (0, 3, 1, 2))


if __name__ == "__main__":
    key = jax.random.PRNGKey(0)
    ks = jax.random.split(key, 8)

    # Up(in_channel=8, out_channel=4, bilinear=True)
    B = 2
    in_channel, out_channel = 8, 4
    C1 = in_channel // 2        # channels of x1 and x2 (concat -> in_channel)
    Cmid = in_channel // 2      # DoubleConv middle channels
    H1 = W1 = 8
    H2 = W2 = 16

    x1 = jax.random.normal(ks[0], (B, C1, H1, W1), jnp.float32)   # deep feature
    x2 = jax.random.normal(ks[1], (B, C1, H2, W2), jnp.float32)   # skip feature

    w1 = jax.random.normal(ks[2], (Cmid, in_channel, 3, 3), jnp.float32) * 0.2
    w2 = jax.random.normal(ks[3], (out_channel, Cmid, 3, 3), jnp.float32) * 0.2
    g1 = 1.0 + 0.1 * jax.random.normal(ks[4], (Cmid,), jnp.float32)
    b1 = 0.1 * jax.random.normal(ks[5], (Cmid,), jnp.float32)
    g2 = 1.0 + 0.1 * jax.random.normal(ks[6], (out_channel,), jnp.float32)
    b2 = 0.1 * jax.random.normal(ks[7], (out_channel,), jnp.float32)
    params = (w1, w2, g1, b1, g2, b2)

    out = jax.block_until_ready(up_forward(x1, x2, params))
    ref = jax.block_until_ready(_reference(x1, x2, params))

    assert out.shape == (B, out_channel, H2, W2), out.shape
    # bf16 MXU operands (f32 accumulation) vs f32 HIGHEST-precision reference
    assert float(jnp.max(jnp.abs(out - ref))) < 5e-2
    print("KERNEL_OK")
</pallas_src>

<mosaic_0001>
module attributes {stable_mosaic.version = 11 : i64} {
  func.func @_up_conv1_kernel(%arg0: i32, %arg1: memref<1x4x8x8xf32, #tpu.memory_space<vmem>>, %arg2: memref<1x4x256xf32, #tpu.memory_space<vmem>>, %arg3: memref<8x16xf32, #tpu.memory_space<vmem>>, %arg4: memref<16x8xf32, #tpu.memory_space<vmem>>, %arg5: memref<4x72xbf16, #tpu.memory_space<vmem>>, %arg6: memref<2x256xbf16, #tpu.memory_space<vmem>>, %arg7: memref<1x4x256xf32, #tpu.memory_space<vmem>>, %arg8: memref<1x4x2xf32, #tpu.memory_space<vmem>>) attributes {dimension_semantics = [#tpu.dimension_semantics<parallel>], iteration_bounds = array<i64: 2>, scalar_prefetch = 0 : i64, scratch_operands = 0 : i64, tpu.core_type = #tpu.core_type<tc>, window_params = [{transform_indices = @transform_0, window_bounds = array<i64: 1, 4, 8, 8>}, {transform_indices = @transform_1, window_bounds = array<i64: 1, 4, 256>}, {pipeline_mode = #tpu.pipeline_mode<synchronous>, transform_indices = @transform_2, window_bounds = array<i64: 8, 16>}, {pipeline_mode = #tpu.pipeline_mode<synchronous>, transform_indices = @transform_3, window_bounds = array<i64: 16, 8>}, {pipeline_mode = #tpu.pipeline_mode<synchronous>, transform_indices = @transform_4, window_bounds = array<i64: 4, 72>}, {pipeline_mode = #tpu.pipeline_mode<synchronous>, transform_indices = @transform_5, window_bounds = array<i64: 2, 256>}, {transform_indices = @transform_6, window_bounds = array<i64: 1, 4, 256>}, {transform_indices = @transform_7, window_bounds = array<i64: 1, 4, 2>}]} {
    %c0 = arith.constant 0 : index
    %c0_0 = arith.constant 0 : index
    %c0_1 = arith.constant 0 : index
    %c0_2 = arith.constant 0 : index
    %0 = vector.load %arg1[%c0, %c0_0, %c0_1, %c0_2] : memref<1x4x8x8xf32, #tpu.memory_space<vmem>>, vector<1x4x8x8xf32>
    %1 = vector.shape_cast %0 : vector<1x4x8x8xf32> to vector<4x8x8xf32>
    %2 = vector.shape_cast %1 : vector<4x8x8xf32> to vector<32x8xf32>
    %c0_3 = arith.constant 0 : index
    %c0_4 = arith.constant 0 : index
    %3 = vector.load %arg3[%c0_3, %c0_4] : memref<8x16xf32, #tpu.memory_space<vmem>>, vector<8x16xf32>
    %cst = arith.constant dense<0.000000e+00> : vector<32x16xf32>
    %4 = tpu.matmul %2, %3, %cst {dimension_numbers = #tpu.dot_dimension_numbers<[1], [0], [0], [1], [0, 0, 1, 1], [], []>} : vector<32x8xf32>, vector<8x16xf32>, vector<32x16xf32> -> vector<32x16xf32>
    %5 = vector.shape_cast %4 : vector<32x16xf32> to vector<4x8x16xf32>
    %c0_5 = arith.constant 0 : index
    %c0_6 = arith.constant 0 : index
    %6 = vector.load %arg4[%c0_5, %c0_6] : memref<16x8xf32, #tpu.memory_space<vmem>>, vector<16x8xf32>
    %7 = vector.shape_cast %6 : vector<16x8xf32> to vector<1x16x8xf32>
    %8 = vector.broadcast %7 : vector<1x16x8xf32> to vector<4x16x8xf32>
    %cst_7 = arith.constant dense<0.000000e+00> : vector<4x16x16xf32>
    %9 = tpu.matmul %8, %5, %cst_7 {dimension_numbers = #tpu.dot_dimension_numbers<[2], [1], [1], [2], [0, 0, 0, 1, 1, 2], [0], [0]>} : vector<4x16x8xf32>, vector<4x8x16xf32>, vector<4x16x16xf32> -> vector<4x16x16xf32>
    %10 = vector.shape_cast %9 : vector<4x16x16xf32> to vector<4x256xf32>
    %c0_8 = arith.constant 0 : index
    %c0_9 = arith.constant 0 : index
    %c0_10 = arith.constant 0 : index
    %11 = vector.load %arg2[%c0_8, %c0_9, %c0_10] : memref<1x4x256xf32, #tpu.memory_space<vmem>>, vector<1x4x256xf32>
    %12 = vector.shape_cast %11 : vector<1x4x256xf32> to vector<4x256xf32>
    %13 = tpu.concatenate %10, %12 in 0 : vector<4x256xf32>, vector<4x256xf32> -> vector<8x256xf32>
    %14 = arith.truncf %13 : vector<8x256xf32> to vector<8x256xbf16>
    %c0_11 = arith.constant 0 : index
    %c0_12 = arith.constant 0 : index
    %15 = vector.load %arg6[%c0_11, %c0_12] : memref<2x256xbf16, #tpu.memory_space<vmem>>, vector<1x256xbf16>
    %c1 = arith.constant 1 : index
    %c0_13 = arith.constant 0 : index
    %16 = vector.load %arg6[%c1, %c0_13] : memref<2x256xbf16, #tpu.memory_space<vmem>>, vector<1x256xbf16>
    %cst_14 = arith.constant 0.000000e+00 : bf16
    %17 = vector.broadcast %cst_14 : bf16 to vector<8x17xbf16>
    %18 = vector.extract_strided_slice %14 {offsets = [0, 0], sizes = [8, 239], strides = [1, 1]} : vector<8x256xbf16> to vector<8x239xbf16>
    %19 = tpu.concatenate %17, %18 in 1 : vector<8x17xbf16>, vector<8x239xbf16> -> vector<8x256xbf16>
    %20 = vector.broadcast %15 : vector<1x256xbf16> to vector<8x256xbf16>
    %21 = arith.mulf %19, %20 : vector<8x256xbf16>
    %cst_15 = arith.constant 0.000000e+00 : bf16
    %22 = vector.broadcast %cst_15 : bf16 to vector<8x16xbf16>
    %23 = vector.extract_strided_slice %14 {offsets = [0, 0], sizes = [8, 240], strides = [1, 1]} : vector<8x256xbf16> to vector<8x240xbf16>
    %24 = tpu.concatenate %22, %23 in 1 : vector<8x16xbf16>, vector<8x240xbf16> -> vector<8x256xbf16>
    %cst_16 = arith.constant 0.000000e+00 : bf16
    %25 = vector.broadcast %cst_16 : bf16 to vector<8x15xbf16>
    %26 = vector.extract_strided_slice %14 {offsets = [0, 0], sizes = [8, 241], strides = [1, 1]} : vector<8x256xbf16> to vector<8x241xbf16>
    %27 = tpu.concatenate %25, %26 in 1 : vector<8x15xbf16>, vector<8x241xbf16> -> vector<8x256xbf16>
    %28 = vector.broadcast %16 : vector<1x256xbf16> to vector<8x256xbf16>
    %29 = arith.mulf %27, %28 : vector<8x256xbf16>
    %cst_17 = arith.constant 0.000000e+00 : bf16
    %30 = vector.broadcast %cst_17 : bf16 to vector<8x1xbf16>
    %31 = vector.extract_strided_slice %14 {offsets = [0, 0], sizes = [8, 255], strides = [1, 1]} : vector<8x256xbf16> to vector<8x255xbf16>
    %32 = tpu.concatenate %30, %31 in 1 : vector<8x1xbf16>, vector<8x255xbf16> -> vector<8x256xbf16>
    %33 = vector.broadcast %15 : vector<1x256xbf16> to vector<8x256xbf16>
    %34 = arith.mulf %32, %33 : vector<8x256xbf16>
    %35 = vector.extract_strided_slice %14 {offsets = [0, 1], sizes = [8, 255], strides = [1, 1]} : vector<8x256xbf16> to vector<8x255xbf16>
    %cst_18 = arith.constant 0.000000e+00 : bf16
    %36 = vector.broadcast %cst_18 : bf16 to vector<8x1xbf16>
    %37 = tpu.concatenate %35, %36 in 1 : vector<8x255xbf16>, vector<8x1xbf16> -> vector<8x256xbf16>
    %38 = vector.broadcast %16 : vector<1x256xbf16> to vector<8x256xbf16>
    %39 = arith.mulf %37, %38 : vector<8x256xbf16>
    %40 = vector.extract_strided_slice %14 {offsets = [0, 15], sizes = [8, 241], strides = [1, 1]} : vector<8x256xbf16> to vector<8x241xbf16>
    %cst_19 = arith.constant 0.000000e+00 : bf16
    %41 = vector.broadcast %cst_19 : bf16 to vector<8x15xbf16>
    %42 = tpu.concatenate %40, %41 in 1 : vector<8x241xbf16>, vector<8x15xbf16> -> vector<8x256xbf16>
    %43 = vector.broadcast %15 : vector<1x256xbf16> to vector<8x256xbf16>
    %44 = arith.mulf %42, %43 : vector<8x256xbf16>
    %45 = vector.extract_strided_slice %14 {offsets = [0, 16], sizes = [8, 240], strides = [1, 1]} : vector<8x256xbf16> to vector<8x240xbf16>
    %cst_20 = arith.constant 0.000000e+00 : bf16
    %46 = vector.broadcast %cst_20 : bf16 to vector<8x16xbf16>
    %47 = tpu.concatenate %45, %46 in 1 : vector<8x240xbf16>, vector<8x16xbf16> -> vector<8x256xbf16>
    %48 = vector.extract_strided_slice %14 {offsets = [0, 17], sizes = [8, 239], strides = [1, 1]} : vector<8x256xbf16> to vector<8x239xbf16>
    %cst_21 = arith.constant 0.000000e+00 : bf16
    %49 = vector.broadcast %cst_21 : bf16 to vector<8x17xbf16>
    %50 = tpu.concatenate %48, %49 in 1 : vector<8x239xbf16>, vector<8x17xbf16> -> vector<8x256xbf16>
    %51 = vector.broadcast %16 : vector<1x256xbf16> to vector<8x256xbf16>
    %52 = arith.mulf %50, %51 : vector<8x256xbf16>
    %53 = tpu.concatenate %21, %24, %29, %34, %14, %39, %44, %47, %52 in 0 : vector<8x256xbf16>, vector<8x256xbf16>, vector<8x256xbf16>, vector<8x256xbf16>, vector<8x256xbf16>, vector<8x256xbf16>, vector<8x256xbf16>, vector<8x256xbf16>, vector<8x256xbf16> -> vector<72x256xbf16>
    %c0_22 = arith.constant 0 : index
    %c0_23 = arith.constant 0 : index
    %54 = vector.load %arg5[%c0_22, %c0_23] : memref<4x72xbf16, #tpu.memory_space<vmem>>, vector<4x72xbf16>
    %cst_24 = arith.constant dense<0.000000e+00> : vector<4x256xf32>
    %55 = tpu.matmul %54, %53, %cst_24 {dimension_numbers = #tpu.dot_dimension_numbers<[1], [0], [0], [1], [0, 0, 1, 1], [], []>} : vector<4x72xbf16>, vector<72x256xbf16>, vector<4x256xf32> -> vector<4x256xf32>
    %c0_25 = arith.constant 0 : index
    %c0_26 = arith.constant 0 : index
    %c0_27 = arith.constant 0 : index
    %56 = vector.load %arg7[%c0_25, %c0_26, %c0_27] : memref<1x4x256xf32, #tpu.memory_space<vmem>>, vector<1x4x256xf32>
    %57 = vector.shape_cast %56 : vector<1x4x256xf32> to vector<4x256xf32>
    %58 = vector.shape_cast %55 : vector<4x256xf32> to vector<1x4x256xf32>
    tpu.vector_store %arg7[%c0_25, %c0_26, %c0_27], %58 {strides = array<i32>} : memref<1x4x256xf32, #tpu.memory_space<vmem>>, vector<1x4x256xf32>,
    %cst_28 = arith.constant dense<0.000000e+00> : vector<4xf32>
    %59 = vector.multi_reduction <add>, %55, %cst_28 [1] : vector<4x256xf32> to vector<4xf32>
    %60 = vector.shape_cast %59 : vector<4xf32> to vector<4x1xf32>
    %61 = arith.mulf %55, %55 : vector<4x256xf32>
    %cst_29 = arith.constant dense<0.000000e+00> : vector<4xf32>
    %62 = vector.multi_reduction <add>, %61, %cst_29 [1] : vector<4x256xf32> to vector<4xf32>
    %63 = vector.shape_cast %62 : vector<4xf32> to vector<4x1xf32>
    %64 = tpu.concatenate %60, %63 in 1 : vector<4x1xf32>, vector<4x1xf32> -> vector<4x2xf32>
    %c0_30 = arith.constant 0 : index
    %c0_31 = arith.constant 0 : index
    %c0_32 = arith.constant 0 : index
    %65 = vector.load %arg8[%c0_30, %c0_31, %c0_32] : memref<1x4x2xf32, #tpu.memory_space<vmem>>, vector<1x4x2xf32>
    %66 = vector.shape_cast %65 : vector<1x4x2xf32> to vector<4x2xf32>
    %67 = vector.shape_cast %64 : vector<4x2xf32> to vector<1x4x2xf32>
    tpu.vector_store %arg8[%c0_30, %c0_31, %c0_32], %67 {strides = array<i32>} : memref<1x4x2xf32, #tpu.memory_space<vmem>>, vector<1x4x2xf32>,
    return
  }
  func.func @transform_0(%arg0: i32) -> (i32, i32, i32, i32) {
    %c0_i32 = arith.constant 0 : i32
    %c0_i32_0 = arith.constant 0 : i32
    %c0_i32_1 = arith.constant 0 : i32
    %c0_i32_2 = arith.constant 0 : i32
    return %arg0, %c0_i32, %c0_i32_0, %c0_i32_1 : i32, i32, i32, i32
  }
  func.func @transform_1(%arg0: i32) -> (i32, i32, i32) {
    %c0_i32 = arith.constant 0 : i32
    %c0_i32_0 = arith.constant 0 : i32
    %c0_i32_1 = arith.constant 0 : i32
    return %arg0, %c0_i32, %c0_i32_0 : i32, i32, i32
  }
  func.func @transform_2(%arg0: i32) -> (i32, i32) {
    %c0_i32 = arith.constant 0 : i32
    %c0_i32_0 = arith.constant 0 : i32
    %c0_i32_1 = arith.constant 0 : i32
    return %c0_i32, %c0_i32_0 : i32, i32
  }
  func.func @transform_3(%arg0: i32) -> (i32, i32) {
    %c0_i32 = arith.constant 0 : i32
    %c0_i32_0 = arith.constant 0 : i32
    %c0_i32_1 = arith.constant 0 : i32
    return %c0_i32, %c0_i32_0 : i32, i32
  }
  func.func @transform_4(%arg0: i32) -> (i32, i32) {
    %c0_i32 = arith.constant 0 : i32
    %c0_i32_0 = arith.constant 0 : i32
    %c0_i32_1 = arith.constant 0 : i32
    return %c0_i32, %c0_i32_0 : i32, i32
  }
  func.func @transform_5(%arg0: i32) -> (i32, i32) {
    %c0_i32 = arith.constant 0 : i32
    %c0_i32_0 = arith.constant 0 : i32
    %c0_i32_1 = arith.constant 0 : i32
    return %c0_i32, %c0_i32_0 : i32, i32
  }
  func.func @transform_6(%arg0: i32) -> (i32, i32, i32) {
    %c0_i32 = arith.constant 0 : i32
    %c0_i32_0 = arith.constant 0 : i32
    %c0_i32_1 = arith.constant 0 : i32
    return %arg0, %c0_i32, %c0_i32_0 : i32, i32, i32
  }
  func.func @transform_7(%arg0: i32) -> (i32, i32, i32) {
    %c0_i32 = arith.constant 0 : i32
    %c0_i32_0 = arith.constant 0 : i32
    %c0_i32_1 = arith.constant 0 : i32
    return %arg0, %c0_i32, %c0_i32_0 : i32, i32, i32
  }
}

</mosaic_0001>

<llo_original>
// kernel: tpu_custom_call.1
$region0: #{tpu_custom_call.1}
  #allocation0 [shape = 'u32[]', space=smem, size = 0x4, offset = 0x4, fixed_abs, tag = 'smem constant byte address 0x4 - core index']
  #allocation1 [shape = 'u32[144,128]{1,0:T(1,128)}', space=vmem, size = 0x12000, scoped, tag = 'internal scratch']
  %s0 = inlined_call_operand.hbm [shape: f32[2,4,8,8], index: 0, kind: input, shape index: {}]
  %s1 = inlined_call_operand.vmem [shape: f32[2,4,256], index: 1, kind: input, shape index: {}]
  %s2 = inlined_call_operand.vmem [shape: f32[8,16], index: 2, kind: input, shape index: {}]
  %s3 = inlined_call_operand.vmem [shape: f32[16,8], index: 3, kind: input, shape index: {}]
  %s4 = inlined_call_operand.vmem [shape: bf16[4,72], index: 4, kind: input, shape index: {}]
  %s5 = inlined_call_operand.vmem [shape: bf16[2,256], index: 5, kind: input, shape index: {}]
  %s6 = inlined_call_operand.hbm [shape: f32[2,4,256], index: 6, kind: output, shape index: {0}]
  %s7 = inlined_call_operand.vmem [shape: f32[2,4,2], index: 7, kind: output, shape index: {1}]
  %8 = xla_tuple %s6, %s7
  %s9 = sld [smem:[#allocation0]]
  $region69: #{tpu_custom_call.1} parent=0
    _
  %s11 = ssub.s32 1, %s9
  %s12 = scalar_select 0, %s11, %s9
  $region1: #{tpu_custom_call.1} parent=0
    #allocation2 [shape = 'u8[32768]{0}', space=vmem, size = 0x8000, scoped, tag = 'input window, operand 0']
    #allocation3 [shape = 's32[2]{0}', space=sflag, size = 0x8, scoped, tag = 'scoped memory for tpu_custom_call.1']
    #allocation4 [shape = 's32[2]{0}', space=sflag, size = 0x8, scoped, tag = 'scoped memory for tpu_custom_call.1']
    #allocation5 [shape = 'u8[8192]{0}', space=vmem, size = 0x2000, scoped, tag = 'output window, operand 0']
    %13 = vsyncpa [#allocation3], 0
    %s14 = scalar_lea.sflag [#allocation3], 1
    %15 = vsyncpa %s14, 0
    %16 = vsyncpa [#allocation4], 0
    %s17 = scalar_lea.sflag [#allocation4], 1
    %18 = vsyncpa %s17, 0
    loop: start=0, step=1, limit=4
    $region2: #{tpu_custom_call.1} parent=1 // loop_pre_header
      _
    $region3: #{tpu_custom_call.1} parent=1 // loop_header
      %s20 = sphi 0, %s24
      %p21 = scmp.ge.s32.totalorder %s20, 4
      %s30 = sphi 0, %s32
      %s33 = sphi 0, %s30
      %s34 = sphi 0, %s33
      %s50 = sphi 0, %s34
      %s56 = sphi 0, %s58
      %s59 = sphi 0, %s56
      %s60 = sphi 0, %s59
      %s76 = sphi 0, %s60
      %s80 = sphi 0, %s80
      %s82 = sphi 0, %s80
      %s83 = sphi 0, %s82
      %s97 = sphi 0, %s83
      %s101 = sphi 0, %s101
      %s103 = sphi 0, %s101
      %s104 = sphi 0, %s103
      %s118 = sphi 0, %s104
      %s122 = sphi 0, %s122
      %s124 = sphi 0, %s122
      %s125 = sphi 0, %s124
      %s139 = sphi 0, %s125
      %s143 = sphi 0, %s143
      %s145 = sphi 0, %s143
      %s146 = sphi 0, %s145
      %s160 = sphi 0, %s146
      %s166 = sphi 0, %s168
      %s169 = sphi 0, %s166
      %s170 = sphi 0, %s169
      %s186 = sphi 0, %s170
      %s192 = sphi 0, %s194
      %s195 = sphi 0, %s192
      %s196 = sphi 0, %s195
      %s212 = sphi 0, %s196
    $region4: #{tpu_custom_call.1} parent=1 // loop_header_branch
      %23 = sbr.rel (%p21) target = $region8
    $region5: #{tpu_custom_call.1} parent=1 // loop_body
      %s25 = ssub.s32 %s20, 1
      %s26 = ssub.s32 %s20, 2
      %s27 = sadd.s32 %s20, 1
      %s28 = ssub.s32 %s20, %s27
      %p29 = scmp.eq.s32.totalorder %s28, 0
      %s31 = sadd.s32 %s30, 1
      %s32 = scalar_select %p29, %s30, %s31
      %p35 = pneg %p29
      %p36 = scmp.eq.s32.totalorder %s20, 1
      %p37 = por %p35, %p36
      %p38 = scmp.ne.s32.totalorder %s30, %s33
      %p39 = scmp.eq.s32.totalorder %s20, 0
      %p40 = por %p38, %p39
      %p41 = scmp.ne.s32.totalorder %s30, %s33
      %p42 = scmp.eq.s32.totalorder %s25, 1
      %p43 = por %p41, %p42
      %p44 = scmp.ne.s32.totalorder %s33, %s34
      %p45 = scmp.eq.s32.totalorder %s25, 0
      %p46 = por %p44, %p45
      %p47 = scmp.ne.s32.totalorder %s33, %s34
      %p48 = scmp.eq.s32.totalorder %s26, 1
      %p49 = por %p47, %p48
      %p51 = scmp.ne.s32.totalorder %s34, %s50
      %p52 = scmp.eq.s32.totalorder %s26, 0
      %p53 = por %p51, %p52
      %s54 = ssub.s32 %s20, %s27
      %p55 = scmp.eq.s32.totalorder %s54, 0
      %s57 = sadd.s32 %s56, 1
      %s58 = scalar_select %p55, %s56, %s57
      %p61 = pneg %p55
      %p62 = scmp.eq.s32.totalorder %s20, 1
      %p63 = por %p61, %p62
      %p64 = scmp.ne.s32.totalorder %s56, %s59
      %p65 = scmp.eq.s32.totalorder %s20, 0
      %p66 = por %p64, %p65
      %p67 = scmp.ne.s32.totalorder %s56, %s59
      %p68 = scmp.eq.s32.totalorder %s25, 1
      %p69 = por %p67, %p68
      %p70 = scmp.ne.s32.totalorder %s59, %s60
      %p71 = scmp.eq.s32.totalorder %s25, 0
      %p72 = por %p70, %p71
      %p73 = scmp.ne.s32.totalorder %s59, %s60
      %p74 = scmp.eq.s32.totalorder %s26, 1
      %p75 = por %p73, %p74
      %p77 = scmp.ne.s32.totalorder %s60, %s76
      %p78 = scmp.eq.s32.totalorder %s26, 0
      %p79 = por %p77, %p78
      %s81 = sadd.s32 %s80, 1
      %p84 = scmp.eq.s32.totalorder %s20, 1
      %p85 = scmp.ne.s32.totalorder %s80, %s82
      %p86 = scmp.eq.s32.totalorder %s20, 0
      %p87 = por %p85, %p86
      %p88 = scmp.ne.s32.totalorder %s80, %s82
      %p89 = scmp.eq.s32.totalorder %s25, 1
      %p90 = por %p88, %p89
      %p91 = scmp.ne.s32.totalorder %s82, %s83
      %p92 = scmp.eq.s32.totalorder %s25, 0
      %p93 = por %p91, %p92
      %p94 = scmp.ne.s32.totalorder %s82, %s83
      %p95 = scmp.eq.s32.totalorder %s26, 1
      %p96 = por %p94, %p95
      %p98 = scmp.ne.s32.totalorder %s83, %s97
      %p99 = scmp.eq.s32.totalorder %s26, 0
      %p100 = por %p98, %p99
      %s102 = sadd.s32 %s101, 1
      %p105 = scmp.eq.s32.totalorder %s20, 1
      %p106 = scmp.ne.s32.totalorder %s101, %s103
      %p107 = scmp.eq.s32.totalorder %s20, 0
      %p108 = por %p106, %p107
      %p109 = scmp.ne.s32.totalorder %s101, %s103
      %p110 = scmp.eq.s32.totalorder %s25, 1
      %p111 = por %p109, %p110
      %p112 = scmp.ne.s32.totalorder %s103, %s104
      %p113 = scmp.eq.s32.totalorder %s25, 0
      %p114 = por %p112, %p113
      %p115 = scmp.ne.s32.totalorder %s103, %s104
      %p116 = scmp.eq.s32.totalorder %s26, 1
      %p117 = por %p115, %p116
      %p119 = scmp.ne.s32.totalorder %s104, %s118
      %p120 = scmp.eq.s32.totalorder %s26, 0
      %p121 = por %p119, %p120
      %s123 = sadd.s32 %s122, 1
      %p126 = scmp.eq.s32.totalorder %s20, 1
      %p127 = scmp.ne.s32.totalorder %s122, %s124
      %p128 = scmp.eq.s32.totalorder %s20, 0
      %p129 = por %p127, %p128
      %p130 = scmp.ne.s32.totalorder %s122, %s124
      %p131 = scmp.eq.s32.totalorder %s25, 1
      %p132 = por %p130, %p131
      %p133 = scmp.ne.s32.totalorder %s124, %s125
      %p134 = scmp.eq.s32.totalorder %s25, 0
      %p135 = por %p133, %p134
      %p136 = scmp.ne.s32.totalorder %s124, %s125
      %p137 = scmp.eq.s32.totalorder %s26, 1
      %p138 = por %p136, %p137
      %p140 = scmp.ne.s32.totalorder %s125, %s139
      %p141 = scmp.eq.s32.totalorder %s26, 0
      %p142 = por %p140, %p141
      %s144 = sadd.s32 %s143, 1
      %p147 = scmp.eq.s32.totalorder %s20, 1
      %p148 = scmp.ne.s32.totalorder %s143, %s145
      %p149 = scmp.eq.s32.totalorder %s20, 0
      %p150 = por %p148, %p149
      %p151 = scmp.ne.s32.totalorder %s143, %s145
      %p152 = scmp.eq.s32.totalorder %s25, 1
      %p153 = por %p151, %p152
      %p154 = scmp.ne.s32.totalorder %s145, %s146
      %p155 = scmp.eq.s32.totalorder %s25, 0
      %p156 = por %p154, %p155
      %p157 = scmp.ne.s32.totalorder %s145, %s146
      %p158 = scmp.eq.s32.totalorder %s26, 1
      %p159 = por %p157, %p158
      %p161 = scmp.ne.s32.totalorder %s146, %s160
      %p162 = scmp.eq.s32.totalorder %s26, 0
      %p163 = por %p161, %p162
      %s164 = ssub.s32 %s20, %s27
      %p165 = scmp.eq.s32.totalorder %s164, 0
      %s167 = sadd.s32 %s166, 1
      %s168 = scalar_select %p165, %s166, %s167
      %p171 = pneg %p165
      %p172 = scmp.eq.s32.totalorder %s20, 1
      %p173 = por %p171, %p172
      %p174 = scmp.ne.s32.totalorder %s166, %s169
      %p175 = scmp.eq.s32.totalorder %s20, 0
      %p176 = por %p174, %p175
      %p177 = scmp.ne.s32.totalorder %s166, %s169
      %p178 = scmp.eq.s32.totalorder %s25, 1
      %p179 = por %p177, %p178
      %p180 = scmp.ne.s32.totalorder %s169, %s170
      %p181 = scmp.eq.s32.totalorder %s25, 0
      %p182 = por %p180, %p181
      %p183 = scmp.ne.s32.totalorder %s169, %s170
      %p184 = scmp.eq.s32.totalorder %s26, 1
      %p185 = por %p183, %p184
      %p187 = scmp.ne.s32.totalorder %s170, %s186
      %p188 = scmp.eq.s32.totalorder %s26, 0
      %p189 = por %p187, %p188
      %s190 = ssub.s32 %s20, %s27
      %p191 = scmp.eq.s32.totalorder %s190, 0
      %s193 = sadd.s32 %s192, 1
      %s194 = scalar_select %p191, %s192, %s193
      %p197 = pneg %p191
      %p198 = scmp.eq.s32.totalorder %s20, 1
      %p199 = por %p197, %p198
      %p200 = scmp.ne.s32.totalorder %s192, %s195
      %p201 = scmp.eq.s32.totalorder %s20, 0
      %p202 = por %p200, %p201
      %p203 = scmp.ne.s32.totalorder %s192, %s195
      %p204 = scmp.eq.s32.totalorder %s25, 1
      %p205 = por %p203, %p204
      %p206 = scmp.ne.s32.totalorder %s195, %s196
      %p207 = scmp.eq.s32.totalorder %s25, 0
      %p208 = por %p206, %p207
      %p209 = scmp.ne.s32.totalorder %s195, %s196
      %p210 = scmp.eq.s32.totalorder %s26, 1
      %p211 = por %p209, %p210
      %p213 = scmp.ne.s32.totalorder %s196, %s212
      %p214 = scmp.eq.s32.totalorder %s26, 0
      %p215 = por %p213, %p214
      %p216 = scmp.le.s32.totalorder 1, %s20
      %p217 = scmp.lt.s32.totalorder %s20, 3
      %p218 = pnand %p216, %p217
      %p219 = pneg %p218
      // Predicated region
      $region9: #{tpu_custom_call.1} parent=5 // pred_check
        _
      $region10: #{tpu_custom_call.1} parent=5 // pred_check_branch
        %221 = sbr.rel (%p218) target = $region12
      $region11: #{tpu_custom_call.1} parent=5 // pred_region
        %s222 = ssub.s32 %s20, 1
        // Predicated region
        $region13: #{tpu_custom_call.1} parent=11 // pred_check
          %p223 = pneg %p93
        $region14: #{tpu_custom_call.1} parent=11 // pred_check_branch
          %225 = sbr.rel (%p223) target = $region16
        $region15: #{tpu_custom_call.1} parent=11 // pred_region
          _
        $region16: #{tpu_custom_call.1} parent=11 // pred_fallthru
          _
        // Predicated region
        $region17: #{tpu_custom_call.1} parent=11 // pred_check
          %p226 = pneg %p114
        $region18: #{tpu_custom_call.1} parent=11 // pred_check_branch
          %228 = sbr.rel (%p226) target = $region20
        $region19: #{tpu_custom_call.1} parent=11 // pred_region
          _
        $region20: #{tpu_custom_call.1} parent=11 // pred_fallthru
          _
        // Predicated region
        $region21: #{tpu_custom_call.1} parent=11 // pred_check
          %p229 = pneg %p135
        $region22: #{tpu_custom_call.1} parent=11 // pred_check_branch
          %231 = sbr.rel (%p229) target = $region24
        $region23: #{tpu_custom_call.1} parent=11 // pred_region
          _
        $region24: #{tpu_custom_call.1} parent=11 // pred_fallthru
          _
        // Predicated region
        $region25: #{tpu_custom_call.1} parent=11 // pred_check
          %p232 = pneg %p156
        $region26: #{tpu_custom_call.1} parent=11 // pred_check_branch
          %234 = sbr.rel (%p232) target = $region28
        $region27: #{tpu_custom_call.1} parent=11 // pred_region
          _
        $region28: #{tpu_custom_call.1} parent=11 // pred_fallthru
          _
      $region12: #{tpu_custom_call.1} parent=5 // pred_fallthru
        _
      %p235 = scmp.lt.s32.totalorder %s20, 2
      // Predicated region
      $region29: #{tpu_custom_call.1} parent=5 // pred_check
        %p236 = pneg %p235
      $region30: #{tpu_custom_call.1} parent=5 // pred_check_branch
        %238 = sbr.rel (%p236) target = $region32
      $region31: #{tpu_custom_call.1} parent=5 // pred_region
        // Predicated region
        $region33: #{tpu_custom_call.1} parent=31 // pred_check
          %p239 = pneg %p40
        $region34: #{tpu_custom_call.1} parent=31 // pred_check_branch
          %241 = sbr.rel (%p239) target = $region36
        $region35: #{tpu_custom_call.1} parent=31 // pred_region
          %s242 = sand.u32 %s30, 1
          %s243 = scalar_lea.sflag [#allocation3], %s242
          %s244 = sand.u32 %s30, 1
          %s245 = smul.addr %s244, 32
          %s246 = scalar_lea.vmem [#allocation2], %s245
          %s248 = ssub.s32 512, 512
          %249 = vsyncadd %s243, %s248
          %s250 = smul.addr %s20, 4
          %s251 = smul.addr %s250, 128
          %s252 = scalar_lea.hbm %s0, %s251
          %s253 = sshll.u32 %s246, 4
          %s254 = int_to_ptr.vmem [resolvable:$true] %s253
          %259 = dma.hbm_to_vmem [thread:$0]  %s252, 512, %s254, %s243, 128, 128, 8
        $region36: #{tpu_custom_call.1} parent=31 // pred_fallthru
          _
        // Predicated region
        $region37: #{tpu_custom_call.1} parent=31 // pred_check
          %p260 = pneg %p66
        $region38: #{tpu_custom_call.1} parent=31 // pred_check_branch
          %262 = sbr.rel (%p260) target = $region40
        $region39: #{tpu_custom_call.1} parent=31 // pred_region
          %p263 = scmp.lt.s32.totalorder %s20, 1
          %s264 = scalar_select %p263, %s20, 1
          %s265 = smul.addr %s264, 2
          %s266 = smul.addr %s265, 4
          %s267 = scalar_lea.vmem %s1, %s266
        $region40: #{tpu_custom_call.1} parent=31 // pred_fallthru
          _
      $region32: #{tpu_custom_call.1} parent=5 // pred_fallthru
        _
      %p268 = scmp.le.s32.totalorder 1, %s20
      %p269 = scmp.lt.s32.totalorder %s20, 3
      %p270 = pnand %p268, %p269
      %p271 = pneg %p270
      // Predicated region
      $region41: #{tpu_custom_call.1} parent=5 // pred_check
        _
      $region42: #{tpu_custom_call.1} parent=5 // pred_check_branch
        %273 = sbr.rel (%p270) target = $region44
      $region43: #{tpu_custom_call.1} parent=5 // pred_region
        %s274 = ssub.s32 %s20, 1
        %s275 = sand.u32 %s33, 1
        %s276 = scalar_lea.sflag [#allocation3], %s275
        %s277 = sand.u32 %s33, 1
        %s278 = smul.addr %s277, 32
        %s279 = scalar_lea.vmem [#allocation2], %s278
        // Predicated region
        $region45: #{tpu_custom_call.1} parent=43 // pred_check
          %p280 = pneg %p46
        $region46: #{tpu_custom_call.1} parent=43 // pred_check_branch
          %282 = sbr.rel (%p280) target = $region48
        $region47: #{tpu_custom_call.1} parent=43 // pred_region
          %283 = dma.done %s276, 512
        $region48: #{tpu_custom_call.1} parent=43 // pred_fallthru
          _
        %s284 = sand.u32 %s33, 1
        %s285 = scalar_lea.sflag [#allocation3], %s284
        %s286 = sand.u32 %s33, 1
        %s287 = smul.addr %s286, 32
        %s288 = scalar_lea.vmem [#allocation2], %s287
        %p289 = pneg %p46
        %p290 = pneg %p43
        %p291 = scmp.lt.s32.totalorder %s25, 1
        %s292 = scalar_select %p291, %s25, 1
        %s293 = smul.addr %s292, 2
        %s294 = smul.addr %s293, 4
        %s295 = scalar_lea.vmem %s1, %s294
        %p296 = pneg %p72
        %p297 = pneg %p69
        %p298 = pneg %p93
        %p299 = pneg %p90
        %p300 = pneg %p114
        %p301 = pneg %p111
        %p302 = pneg %p135
        %p303 = pneg %p132
        %p304 = pneg %p156
        %p305 = pneg %p153
        %p306 = pneg %p182
        %p307 = pneg %p179
        %s308 = sand.u32 %s169, 1
        %s309 = scalar_lea.sflag [#allocation4], %s308
        %s310 = sand.u32 %s169, 1
        %s311 = smul.addr %s310, 8
        %s312 = scalar_lea.vmem [#allocation5], %s311
        %p313 = pneg %p208
        %p314 = pneg %p205
        %p315 = scmp.lt.s32.totalorder %s25, 1
        %s316 = scalar_select %p315, %s25, 1
        %s317 = smul.addr %s316, 4
        %s318 = scalar_lea.vmem %s7, %s317
        %p319 = scmp.lt.s32.totalorder %s25, 1
        %s320 = scalar_select %p319, %s25, 1
        %s321 = smul.addr %s320, 2
        %s322 = smul.addr %s321, 4
        %s323 = scalar_lea.vmem %s1, %s322
        %p324 = scmp.lt.s32.totalorder %s25, 1
        %s325 = scalar_select %p324, %s25, 1
        %s326 = smul.addr %s325, 4
        %s327 = scalar_lea.vmem %s7, %s326
        %v329 = vld [vmem:[%s279] sm:$0xff]
        %v330 = vld [vmem:[%s279 + $0x8] sm:$0xff]
        %v331 = vld [vmem:[%s279 + $0x10] sm:$0xff]
        %v332 = vld [vmem:[%s279 + $0x18] sm:$0xff]
        %v333 = vld [vmem:[%s2] sm:$0xff]
        %vm334 = vcmask 64512
        %v336 = vsel %vm334, %v329, 0
        %v339 = vsel %vm334, %v330, 0
        %v342 = vsel %vm334, %v331, 0
        %v345 = vsel %vm334, %v332, 0
        %347 = vmatprep.subr.mxu0 0.0
        %348 = vmatpush1.msra.mxu0 0.0
        %349 = vmatprep.subr.mxu0 0.0
        %350 = vmatpush1.msra.mxu0 0.0
        %351 = vmatprep.subr.mxu0 0.0
        %352 = vmatpush1.msra.mxu0 0.0
        %353 = vmatprep.subr.mxu0 0.0
        %354 = vmatpush1.msra.mxu0 0.0
        %355 = vmatprep.subr.mxu0 0.0
        %356 = vmatpush1.msra.mxu0 0.0
        %357 = vmatprep.subr.mxu0 0.0
        %358 = vmatpush1.msra.mxu0 0.0
        %359 = vmatprep.subr.mxu0 0.0
        %360 = vmatpush1.msra.mxu0 0.0
        %361 = vmatprep.subr.mxu0 0.0
        %362 = vmatpush1.msra.mxu0 0.0
        %363 = vmatprep.subr.mxu0 0.0
        %364 = vmatpush1.msra.mxu0 0.0
        %365 = vmatprep.subr.mxu0 0.0
        %366 = vmatpush1.msra.mxu0 0.0
        %367 = vmatprep.subr.mxu0 0.0
        %368 = vmatpush1.msra.mxu0 0.0
        %369 = vmatprep.subr.mxu0 0.0
        %370 = vmatpush1.msra.mxu0 0.0
        %371 = vmatprep.subr.mxu0 0.0
        %372 = vmatpush1.msra.mxu0 0.0
        %373 = vmatprep.subr.mxu0 0.0
        %374 = vmatpush1.msra.mxu0 0.0
        %375 = vmatprep.subr.mxu0 0.0
        %376 = vmatpush1.msra.mxu0 0.0
        %377 = vmatprep.subr.mxu0 0.0
        %378 = vmatpush1.msra.mxu0 %v333
        %379 = vmatprep.subr.mxu0 0.0
        %380 = vmatpush2.msra.mxu0 0.0
        %381 = vmatprep.subr.mxu0 0.0
        %382 = vmatpush2.msra.mxu0 0.0
        %383 = vmatprep.subr.mxu0 0.0
        %384 = vmatpush2.msra.mxu0 0.0
        %385 = vmatprep.subr.mxu0 0.0
        %386 = vmatpush2.msra.mxu0 0.0
        %387 = vmatprep.subr.mxu0 0.0
        %388 = vmatpush2.msra.mxu0 0.0
        %389 = vmatprep.subr.mxu0 0.0
        %390 = vmatpush2.msra.mxu0 0.0
        %391 = vmatprep.subr.mxu0 0.0
        %392 = vmatpush2.msra.mxu0 0.0
        %393 = vmatprep.subr.mxu0 0.0
        %394 = vmatpush2.msra.mxu0 0.0
        %395 = vmatprep.subr.mxu0 0.0
        %396 = vmatpush2.msra.mxu0 0.0
        %397 = vmatprep.subr.mxu0 0.0
        %398 = vmatpush2.msra.mxu0 0.0
        %399 = vmatprep.subr.mxu0 0.0
        %400 = vmatpush2.msra.mxu0 0.0
        %401 = vmatprep.subr.mxu0 0.0
        %402 = vmatpush2.msra.mxu0 0.0
        %403 = vmatprep.subr.mxu0 0.0
        %404 = vmatpush2.msra.mxu0 0.0
        %405 = vmatprep.subr.mxu0 0.0
        %406 = vmatpush2.msra.mxu0 0.0
        %407 = vmatprep.subr.mxu0 0.0
        %408 = vmatpush2.msra.mxu0 0.0
        %409 = vmatprep.subr.mxu0 0.0
        %410 = vmatpush2.msra.mxu0 0.0
        %411 = vmatprep.mubr.f32.mxu0 0.0
        %412 = vmatmul.mubr.f32.gmra.mxu0 %v336
        %v413 = vpop.f32.mrf.mxu0
        %v414 = vadd.f32 0.0, %v413
        %v415 = vpop.f32.mrf.mxu0
        %416 = vmatprep.mubr.f32.mxu0 0.0
        %417 = vmatmul.mubr.f32.gmra.mxu0 %v339
        %v418 = vpop.f32.mrf.mxu0
        %v419 = vadd.f32 0.0, %v418
        %v420 = vpop.f32.mrf.mxu0
        %421 = vmatprep.mubr.f32.mxu0 0.0
        %422 = vmatmul.mubr.f32.gmra.mxu0 %v342
        %v423 = vpop.f32.mrf.mxu0
        %v424 = vadd.f32 0.0, %v423
        %v425 = vpop.f32.mrf.mxu0
        %426 = vmatprep.mubr.f32.mxu0 0.0
        %427 = vmatmul.mubr.f32.gmra.mxu0 %v345
        %v428 = vpop.f32.mrf.mxu0
        %v429 = vadd.f32 0.0, %v428
        %v430 = vpop.f32.mrf.mxu0
        %431 = vdwg.mxu0
        %v432 = vld [vmem:[%s3] sm:$0xff]
        %v433 = vld [vmem:[%s3 + $0x8] sm:$0xff]
        %v435 = vsel %vm334, %v432, 0
        %v438 = vsel %vm334, %v433, 0
        %440 = vmatprep.subr.mxu0 0.0
        %441 = vmatpush1.msra.mxu0 0.0
        %442 = vmatprep.subr.mxu0 0.0
        %443 = vmatpush1.msra.mxu0 0.0
        %444 = vmatprep.subr.mxu0 0.0
        %445 = vmatpush1.msra.mxu0 0.0
        %446 = vmatprep.subr.mxu0 0.0
        %447 = vmatpush1.msra.mxu0 0.0
        %448 = vmatprep.subr.mxu0 0.0
        %449 = vmatpush1.msra.mxu0 0.0
        %450 = vmatprep.subr.mxu0 0.0
        %451 = vmatpush1.msra.mxu0 0.0
        %452 = vmatprep.subr.mxu0 0.0
        %453 = vmatpush1.msra.mxu0 0.0
        %454 = vmatprep.subr.mxu0 0.0
        %455 = vmatpush1.msra.mxu0 0.0
        %456 = vmatprep.subr.mxu0 0.0
        %457 = vmatpush1.msra.mxu0 0.0
        %458 = vmatprep.subr.mxu0 0.0
        %459 = vmatpush1.msra.mxu0 0.0
        %460 = vmatprep.subr.mxu0 0.0
        %461 = vmatpush1.msra.mxu0 0.0
        %462 = vmatprep.subr.mxu0 0.0
        %463 = vmatpush1.msra.mxu0 0.0
        %464 = vmatprep.subr.mxu0 0.0
        %465 = vmatpush1.msra.mxu0 0.0
        %466 = vmatprep.subr.mxu0 0.0
        %467 = vmatpush1.msra.mxu0 0.0
        %468 = vmatprep.subr.mxu0 0.0
        %469 = vmatpush1.msra.mxu0 0.0
        %470 = vmatprep.subr.mxu0 0.0
        %471 = vmatpush1.msra.mxu0 %v414
        %472 = vmatprep.subr.mxu0 0.0
        %473 = vmatpush2.msra.mxu0 0.0
        %474 = vmatprep.subr.mxu0 0.0
        %475 = vmatpush2.msra.mxu0 0.0
        %476 = vmatprep.subr.mxu0 0.0
        %477 = vmatpush2.msra.mxu0 0.0
        %478 = vmatprep.subr.mxu0 0.0
        %479 = vmatpush2.msra.mxu0 0.0
        %480 = vmatprep.subr.mxu0 0.0
        %481 = vmatpush2.msra.mxu0 0.0
        %482 = vmatprep.subr.mxu0 0.0
        %483 = vmatpush2.msra.mxu0 0.0
        %484 = vmatprep.subr.mxu0 0.0
        %485 = vmatpush2.msra.mxu0 0.0
        %486 = vmatprep.subr.mxu0 0.0
        %487 = vmatpush2.msra.mxu0 0.0
        %488 = vmatprep.subr.mxu0 0.0
        %489 = vmatpush2.msra.mxu0 0.0
        %490 = vmatprep.subr.mxu0 0.0
        %491 = vmatpush2.msra.mxu0 0.0
        %492 = vmatprep.subr.mxu0 0.0
        %493 = vmatpush2.msra.mxu0 0.0
        %494 = vmatprep.subr.mxu0 0.0
        %495 = vmatpush2.msra.mxu0 0.0
        %496 = vmatprep.subr.mxu0 0.0
        %497 = vmatpush2.msra.mxu0 0.0
        %498 = vmatprep.subr.mxu0 0.0
        %499 = vmatpush2.msra.mxu0 0.0
        %500 = vmatprep.subr.mxu0 0.0
        %501 = vmatpush2.msra.mxu0 0.0
        %502 = vmatprep.subr.mxu0 0.0
        %503 = vmatpush2.msra.mxu0 0.0
        %504 = vmatprep.mubr.f32.mxu0 0.0
        %505 = vmatmul.mubr.f32.gmra.mxu0 %v435
        %v506 = vpop.f32.mrf.mxu0
        %v507 = vadd.f32 0.0, %v506
        %v508 = vpop.f32.mrf.mxu0
        %509 = vmatprep.mubr.f32.mxu0 0.0
        %510 = vmatmul.mubr.f32.gmra.mxu0 %v438
        %v511 = vpop.f32.mrf.mxu0
        %v512 = vadd.f32 0.0, %v511
        %v513 = vpop.f32.mrf.mxu0
        %514 = vdwg.mxu0
        %515 = vmatprep.subr.mxu0 0.0
        %516 = vmatpush1.msra.mxu0 0.0
        %517 = vmatprep.subr.mxu0 0.0
        %518 = vmatpush1.msra.mxu0 0.0
        %519 = vmatprep.subr.mxu0 0.0
        %520 = vmatpush1.msra.mxu0 0.0
        %521 = vmatprep.subr.mxu0 0.0
        %522 = vmatpush1.msra.mxu0 0.0
        %523 = vmatprep.subr.mxu0 0.0
        %524 = vmatpush1.msra.mxu0 0.0
        %525 = vmatprep.subr.mxu0 0.0
        %526 = vmatpush1.msra.mxu0 0.0
        %527 = vmatprep.subr.mxu0 0.0
        %528 = vmatpush1.msra.mxu0 0.0
        %529 = vmatprep.subr.mxu0 0.0
        %530 = vmatpush1.msra.mxu0 0.0
        %531 = vmatprep.subr.mxu0 0.0
        %532 = vmatpush1.msra.mxu0 0.0
        %533 = vmatprep.subr.mxu0 0.0
        %534 = vmatpush1.msra.mxu0 0.0
        %535 = vmatprep.subr.mxu0 0.0
        %536 = vmatpush1.msra.mxu0 0.0
        %537 = vmatprep.subr.mxu0 0.0
        %538 = vmatpush1.msra.mxu0 0.0
        %539 = vmatprep.subr.mxu0 0.0
        %540 = vmatpush1.msra.mxu0 0.0
        %541 = vmatprep.subr.mxu0 0.0
        %542 = vmatpush1.msra.mxu0 0.0
        %543 = vmatprep.subr.mxu0 0.0
        %544 = vmatpush1.msra.mxu0 0.0
        %545 = vmatprep.subr.mxu0 0.0
        %546 = vmatpush1.msra.mxu0 %v419
        %547 = vmatprep.subr.mxu0 0.0
        %548 = vmatpush2.msra.mxu0 0.0
        %549 = vmatprep.subr.mxu0 0.0
        %550 = vmatpush2.msra.mxu0 0.0
        %551 = vmatprep.subr.mxu0 0.0
        %552 = vmatpush2.msra.mxu0 0.0
        %553 = vmatprep.subr.mxu0 0.0
        %554 = vmatpush2.msra.mxu0 0.0
        %555 = vmatprep.subr.mxu0 0.0
        %556 = vmatpush2.msra.mxu0 0.0
        %557 = vmatprep.subr.mxu0 0.0
        %558 = vmatpush2.msra.mxu0 0.0
        %559 = vmatprep.subr.mxu0 0.0
        %560 = vmatpush2.msra.mxu0 0.0
        %561 = vmatprep.subr.mxu0 0.0
        %562 = vmatpush2.msra.mxu0 0.0
        %563 = vmatprep.subr.mxu0 0.0
        %564 = vmatpush2.msra.mxu0 0.0
        %565 = vmatprep.subr.mxu0 0.0
        %566 = vmatpush2.msra.mxu0 0.0
        %567 = vmatprep.subr.mxu0 0.0
        %568 = vmatpush2.msra.mxu0 0.0
        %569 = vmatprep.subr.mxu0 0.0
        %570 = vmatpush2.msra.mxu0 0.0
        %571 = vmatprep.subr.mxu0 0.0
        %572 = vmatpush2.msra.mxu0 0.0
        %573 = vmatprep.subr.mxu0 0.0
        %574 = vmatpush2.msra.mxu0 0.0
        %575 = vmatprep.subr.mxu0 0.0
        %576 = vmatpush2.msra.mxu0 0.0
        %577 = vmatprep.subr.mxu0 0.0
        %578 = vmatpush2.msra.mxu0 0.0
        %579 = vmatprep.mubr.f32.mxu0 0.0
        %580 = vmatmul.mubr.f32.gmra.mxu0 %v435
        %v581 = vpop.f32.mrf.mxu0
        %v582 = vadd.f32 0.0, %v581
        %v583 = vpop.f32.mrf.mxu0
        %584 = vmatprep.mubr.f32.mxu0 0.0
        %585 = vmatmul.mubr.f32.gmra.mxu0 %v438
        %v586 = vpop.f32.mrf.mxu0
        %v587 = vadd.f32 0.0, %v586
        %v588 = vpop.f32.mrf.mxu0
        %589 = vdwg.mxu0
        %590 = vmatprep.subr.mxu0 0.0
        %591 = vmatpush1.msra.mxu0 0.0
        %592 = vmatprep.subr.mxu0 0.0
        %593 = vmatpush1.msra.mxu0 0.0
        %594 = vmatprep.subr.mxu0 0.0
        %595 = vmatpush1.msra.mxu0 0.0
        %596 = vmatprep.subr.mxu0 0.0
        %597 = vmatpush1.msra.mxu0 0.0
        %598 = vmatprep.subr.mxu0 0.0
        %599 = vmatpush1.msra.mxu0 0.0
        %600 = vmatprep.subr.mxu0 0.0
        %601 = vmatpush1.msra.mxu0 0.0
        %602 = vmatprep.subr.mxu0 0.0
        %603 = vmatpush1.msra.mxu0 0.0
        %604 = vmatprep.subr.mxu0 0.0
        %605 = vmatpush1.msra.mxu0 0.0
        %606 = vmatprep.subr.mxu0 0.0
        %607 = vmatpush1.msra.mxu0 0.0
        %608 = vmatprep.subr.mxu0 0.0
        %609 = vmatpush1.msra.mxu0 0.0
        %610 = vmatprep.subr.mxu0 0.0
        %611 = vmatpush1.msra.mxu0 0.0
        %612 = vmatprep.subr.mxu0 0.0
        %613 = vmatpush1.msra.mxu0 0.0
        %614 = vmatprep.subr.mxu0 0.0
        %615 = vmatpush1.msra.mxu0 0.0
        %616 = vmatprep.subr.mxu0 0.0
        %617 = vmatpush1.msra.mxu0 0.0
        %618 = vmatprep.subr.mxu0 0.0
        %619 = vmatpush1.msra.mxu0 0.0
        %620 = vmatprep.subr.mxu0 0.0
        %621 = vmatpush1.msra.mxu0 %v424
        %622 = vmatprep.subr.mxu0 0.0
        %623 = vmatpush2.msra.mxu0 0.0
        %624 = vmatprep.subr.mxu0 0.0
        %625 = vmatpush2.msra.mxu0 0.0
        %626 = vmatprep.subr.mxu0 0.0
        %627 = vmatpush2.msra.mxu0 0.0
        %628 = vmatprep.subr.mxu0 0.0
        %629 = vmatpush2.msra.mxu0 0.0
        %630 = vmatprep.subr.mxu0 0.0
        %631 = vmatpush2.msra.mxu0 0.0
        %632 = vmatprep.subr.mxu0 0.0
        %633 = vmatpush2.msra.mxu0 0.0
        %634 = vmatprep.subr.mxu0 0.0
        %635 = vmatpush2.msra.mxu0 0.0
        %636 = vmatprep.subr.mxu0 0.0
        %637 = vmatpush2.msra.mxu0 0.0
        %638 = vmatprep.subr.mxu0 0.0
        %639 = vmatpush2.msra.mxu0 0.0
        %640 = vmatprep.subr.mxu0 0.0
        %641 = vmatpush2.msra.mxu0 0.0
        %642 = vmatprep.subr.mxu0 0.0
        %643 = vmatpush2.msra.mxu0 0.0
        %644 = vmatprep.subr.mxu0 0.0
        %645 = vmatpush2.msra.mxu0 0.0
        %646 = vmatprep.subr.mxu0 0.0
        %647 = vmatpush2.msra.mxu0 0.0
        %648 = vmatprep.subr.mxu0 0.0
        %649 = vmatpush2.msra.mxu0 0.0
        %650 = vmatprep.subr.mxu0 0.0
        %651 = vmatpush2.msra.mxu0 0.0
        %652 = vmatprep.subr.mxu0 0.0
        %653 = vmatpush2.msra.mxu0 0.0
        %654 = vmatprep.mubr.f32.mxu0 0.0
        %655 = vmatmul.mubr.f32.gmra.mxu0 %v435
        %v656 = vpop.f32.mrf.mxu0
        %v657 = vadd.f32 0.0, %v656
        %v658 = vpop.f32.mrf.mxu0
        %659 = vmatprep.mubr.f32.mxu0 0.0
        %660 = vmatmul.mubr.f32.gmra.mxu0 %v438
        %v661 = vpop.f32.mrf.mxu0
        %v662 = vadd.f32 0.0, %v661
        %v663 = vpop.f32.mrf.mxu0
        %664 = vdwg.mxu0
        %665 = vmatprep.subr.mxu0 0.0
        %666 = vmatpush1.msra.mxu0 0.0
        %667 = vmatprep.subr.mxu0 0.0
        %668 = vmatpush1.msra.mxu0 0.0
        %669 = vmatprep.subr.mxu0 0.0
        %670 = vmatpush1.msra.mxu0 0.0
        %671 = vmatprep.subr.mxu0 0.0
        %672 = vmatpush1.msra.mxu0 0.0
        %673 = vmatprep.subr.mxu0 0.0
        %674 = vmatpush1.msra.mxu0 0.0
        %675 = vmatprep.subr.mxu0 0.0
        %676 = vmatpush1.msra.mxu0 0.0
        %677 = vmatprep.subr.mxu0 0.0
        %678 = vmatpush1.msra.mxu0 0.0
        %679 = vmatprep.subr.mxu0 0.0
        %680 = vmatpush1.msra.mxu0 0.0
        %681 = vmatprep.subr.mxu0 0.0
        %682 = vmatpush1.msra.mxu0 0.0
        %683 = vmatprep.subr.mxu0 0.0
        %684 = vmatpush1.msra.mxu0 0.0
        %685 = vmatprep.subr.mxu0 0.0
        %686 = vmatpush1.msra.mxu0 0.0
        %687 = vmatprep.subr.mxu0 0.0
        %688 = vmatpush1.msra.mxu0 0.0
        %689 = vmatprep.subr.mxu0 0.0
        %690 = vmatpush1.msra.mxu0 0.0
        %691 = vmatprep.subr.mxu0 0.0
        %692 = vmatpush1.msra.mxu0 0.0
        %693 = vmatprep.subr.mxu0 0.0
        %694 = vmatpush1.msra.mxu0 0.0
        %695 = vmatprep.subr.mxu0 0.0
        %696 = vmatpush1.msra.mxu0 %v429
        %697 = vmatprep.subr.mxu0 0.0
        %698 = vmatpush2.msra.mxu0 0.0
        %699 = vmatprep.subr.mxu0 0.0
        %700 = vmatpush2.msra.mxu0 0.0
        %701 = vmatprep.subr.mxu0 0.0
        %702 = vmatpush2.msra.mxu0 0.0
        %703 = vmatprep.subr.mxu0 0.0
        %704 = vmatpush2.msra.mxu0 0.0
        %705 = vmatprep.subr.mxu0 0.0
        %706 = vmatpush2.msra.mxu0 0.0
        %707 = vmatprep.subr.mxu0 0.0
        %708 = vmatpush2.msra.mxu0 0.0
        %709 = vmatprep.subr.mxu0 0.0
        %710 = vmatpush2.msra.mxu0 0.0
        %711 = vmatprep.subr.mxu0 0.0
        %712 = vmatpush2.msra.mxu0 0.0
        %713 = vmatprep.subr.mxu0 0.0
        %714 = vmatpush2.msra.mxu0 0.0
        %715 = vmatprep.subr.mxu0 0.0
        %716 = vmatpush2.msra.mxu0 0.0
        %717 = vmatprep.subr.mxu0 0.0
        %718 = vmatpush2.msra.mxu0 0.0
        %719 = vmatprep.subr.mxu0 0.0
        %720 = vmatpush2.msra.mxu0 0.0
        %721 = vmatprep.subr.mxu0 0.0
        %722 = vmatpush2.msra.mxu0 0.0
        %723 = vmatprep.subr.mxu0 0.0
        %724 = vmatpush2.msra.mxu0 0.0
        %725 = vmatprep.subr.mxu0 0.0
        %726 = vmatpush2.msra.mxu0 0.0
        %727 = vmatprep.subr.mxu0 0.0
        %728 = vmatpush2.msra.mxu0 0.0
        %729 = vmatprep.mubr.f32.mxu0 0.0
        %730 = vmatmul.mubr.f32.gmra.mxu0 %v435
        %v731 = vpop.f32.mrf.mxu0
        %v732 = vadd.f32 0.0, %v731
        %v733 = vpop.f32.mrf.mxu0
        %734 = vmatprep.mubr.f32.mxu0 0.0
        %735 = vmatmul.mubr.f32.gmra.mxu0 %v438
        %v736 = vpop.f32.mrf.mxu0
        %v737 = vadd.f32 0.0, %v736
        %v738 = vpop.f32.mrf.mxu0
        %739 = vdwg.mxu0
        %v740 = vcombine.low %v507, %v657
        %v741 = vcombine.high %v507, %v657
        %v743 = vunpack.c.l.s4 1983009808
        %v744 = vunpack.c.0.s8 %v743
        %v745 = vlaneseq
        %v746 = vshrl.u32 %v745, 7
        %v747 = vsub.s32 %v744, %v746
        %v748 = vrot.slane %v740, %v747
        %v750 = vunpack.c.l.s4 1983009808
        %v751 = vunpack.c.0.s8 %v750
        %v752 = vlaneseq
        %v753 = vshrl.u32 %v752, 7
        %v754 = vsub.s32 %v751, %v753
        %v755 = vrot.slane %v741, %v754
        %v756 = vcombine.low %v582, %v732
        %v757 = vcombine.high %v582, %v732
        %v759 = vunpack.c.l.s4 1983009808
        %v760 = vunpack.c.0.s8 %v759
        %v761 = vlaneseq
        %v762 = vshrl.u32 %v761, 7
        %v763 = vsub.s32 %v760, %v762
        %v764 = vrot.slane %v756, %v763
        %v766 = vunpack.c.l.s4 1983009808
        %v767 = vunpack.c.0.s8 %v766
        %v768 = vlaneseq
        %v769 = vshrl.u32 %v768, 7
        %v770 = vsub.s32 %v767, %v769
        %v771 = vrot.slane %v757, %v770
        %v772 = vcombine.low %v748, %v764
        %v773 = vcombine.high %v748, %v764
        %v775 = vunpack.c.l.s4 1934713408
        %v776 = vunpack.c.0.s8 %v775
        %v777 = vlaneseq
        %v778 = vshrl.u32 %v777, 7
        %v779 = vsub.s32 %v776, %v778
        %v780 = vrot.slane %v772, %v779
        %v782 = vunpack.c.l.s4 1934713408
        %v783 = vunpack.c.0.s8 %v782
        %v784 = vlaneseq
        %v785 = vshrl.u32 %v784, 7
        %v786 = vsub.s32 %v783, %v785
        %v787 = vrot.slane %v773, %v786
        %v788 = vcombine.low %v755, %v771
        %v789 = vcombine.high %v755, %v771
        %v791 = vunpack.c.l.s4 1934713408
        %v792 = vunpack.c.0.s8 %v791
        %v793 = vlaneseq
        %v794 = vshrl.u32 %v793, 7
        %v795 = vsub.s32 %v792, %v794
        %v796 = vrot.slane %v788, %v795
        %v798 = vunpack.c.l.s4 1934713408
        %v799 = vunpack.c.0.s8 %v798
        %v800 = vlaneseq
        %v801 = vshrl.u32 %v800, 7
        %v802 = vsub.s32 %v799, %v801
        %v803 = vrot.slane %v789, %v802
        %v804 = vcombine.high %v780, 0.0
        %v805 = vcombine.high %v787, 0.0
        %v806 = vcombine.high %v796, 0.0
        %v807 = vcombine.high %v803, 0.0
        %v808 = vcombine.low %v512, %v662
        %v809 = vcombine.high %v512, %v662
        %v811 = vunpack.c.l.s4 1983009808
        %v812 = vunpack.c.0.s8 %v811
        %v813 = vlaneseq
        %v814 = vshrl.u32 %v813, 7
        %v815 = vsub.s32 %v812, %v814
        %v816 = vrot.slane %v808, %v815
        %v818 = vunpack.c.l.s4 1983009808
        %v819 = vunpack.c.0.s8 %v818
        %v820 = vlaneseq
        %v821 = vshrl.u32 %v820, 7
        %v822 = vsub.s32 %v819, %v821
        %v823 = vrot.slane %v809, %v822
        %v824 = vcombine.low %v587, %v737
        %v825 = vcombine.high %v587, %v737
        %v827 = vunpack.c.l.s4 1983009808
        %v828 = vunpack.c.0.s8 %v827
        %v829 = vlaneseq
        %v830 = vshrl.u32 %v829, 7
        %v831 = vsub.s32 %v828, %v830
        %v832 = vrot.slane %v824, %v831
        %v834 = vunpack.c.l.s4 1983009808
        %v835 = vunpack.c.0.s8 %v834
        %v836 = vlaneseq
        %v837 = vshrl.u32 %v836, 7
        %v838 = vsub.s32 %v835, %v837
        %v839 = vrot.slane %v825, %v838
        %v840 = vcombine.low %v816, %v832
        %v841 = vcombine.high %v816, %v832
        %v843 = vunpack.c.l.s4 1934713408
        %v844 = vunpack.c.0.s8 %v843
        %v845 = vlaneseq
        %v846 = vshrl.u32 %v845, 7
        %v847 = vsub.s32 %v844, %v846
        %v848 = vrot.slane %v840, %v847
        %v850 = vunpack.c.l.s4 1934713408
        %v851 = vunpack.c.0.s8 %v850
        %v852 = vlaneseq
        %v853 = vshrl.u32 %v852, 7
        %v854 = vsub.s32 %v851, %v853
        %v855 = vrot.slane %v841, %v854
        %v856 = vcombine.low %v823, %v839
        %v857 = vcombine.high %v823, %v839
        %v859 = vunpack.c.l.s4 1934713408
        %v860 = vunpack.c.0.s8 %v859
        %v861 = vlaneseq
        %v862 = vshrl.u32 %v861, 7
        %v863 = vsub.s32 %v860, %v862
        %v864 = vrot.slane %v856, %v863
        %v866 = vunpack.c.l.s4 1934713408
        %v867 = vunpack.c.0.s8 %v866
        %v868 = vlaneseq
        %v869 = vshrl.u32 %v868, 7
        %v870 = vsub.s32 %v867, %v869
        %v871 = vrot.slane %v857, %v870
        %v872 = vcombine.high %v848, 0.0
        %v873 = vcombine.high %v855, 0.0
        %v874 = vcombine.high %v864, 0.0
        %v875 = vcombine.high %v871, 0.0
        %877 = vrot.lane.b32.xlu0 %v804, 16
        %v878 = vpop.permute.xlu0 %877
        %881 = vrot.lane.b32.xlu0 %v787, 32
        %v882 = vpop.permute.xlu0 %881
        %885 = vrot.lane.b32.xlu0 %v805, 48
        %v886 = vpop.permute.xlu0 %885
        %889 = vrot.lane.b32.xlu0 %v796, 64
        %v890 = vpop.permute.xlu0 %889
        %893 = vrot.lane.b32.xlu0 %v806, 80
        %v894 = vpop.permute.xlu0 %893
        %897 = vrot.lane.b32.xlu0 %v803, 96
        %v898 = vpop.permute.xlu0 %897
        %901 = vrot.lane.b32.xlu0 %v807, 112
        %v902 = vpop.permute.xlu0 %901
        %905 = vrot.lane.b32.xlu0 %v872, 16
        %v906 = vpop.permute.xlu0 %905
        %909 = vrot.lane.b32.xlu0 %v855, 32
        %v910 = vpop.permute.xlu0 %909
        %913 = vrot.lane.b32.xlu0 %v873, 48
        %v914 = vpop.permute.xlu0 %913
        %917 = vrot.lane.b32.xlu0 %v864, 64
        %v918 = vpop.permute.xlu0 %917
        %921 = vrot.lane.b32.xlu0 %v874, 80
        %v922 = vpop.permute.xlu0 %921
        %925 = vrot.lane.b32.xlu0 %v871, 96
        %v926 = vpop.permute.xlu0 %925
        %929 = vrot.lane.b32.xlu0 %v875, 112
        %v930 = vpop.permute.xlu0 %929
        %vm932 = vcmask 130048
        %v933 = vsel %vm932, %v780, %v878
        %vm934 = vcmask 261120
        %v935 = vsel %vm934, %v933, %v882
        %vm936 = vcmask 392192
        %v937 = vsel %vm936, %v935, %v886
        %vm938 = vcmask 523264
        %v939 = vsel %vm938, %v937, %v890
        %vm940 = vcmask 654336
        %v941 = vsel %vm940, %v939, %v894
        %vm942 = vcmask 785408
        %v943 = vsel %vm942, %v941, %v898
        %vm944 = vcmask 916480
        %v945 = vsel %vm944, %v943, %v902
        %v946 = vsel %vm932, %v848, %v906
        %v947 = vsel %vm934, %v946, %v910
        %v948 = vsel %vm936, %v947, %v914
        %v949 = vsel %vm938, %v948, %v918
        %v950 = vsel %vm940, %v949, %v922
        %v951 = vsel %vm942, %v950, %v926
        %v952 = vsel %vm944, %v951, %v930
        %v953 = vld [vmem:[%s323] sm:$0xff]
        %v955 = vcombine.low %v953, %v953
        %vm957 = vcmask 1043456
        %v958 = vsel %vm957, %v945, %v955
        %v959 = vsel %vm957, %v952, %v953
        %v960 = vpack.c.bf16 %v958, %v958
        %v961 = vpack.c.bf16 %v959, %v959
        %v962 = vld [vmem:[%s5] sm:$0x3]
        %965 = vrot.lane.b32.xlu0 %v960, 17
        %v966 = vpop.permute.xlu0 %965
        %967 = vrot.lane.b32.xlu0 %v961, 17
        %v968 = vpop.permute.xlu0 %967
        %vm969 = vcmask 138240
        %v970 = vsel %vm969, %v966, %v968
        %vm972 = vcmask 138240
        %v975 = vsel %vm972, 0, %v966
        %v979 = vunpack.c.l.s4 1966171168
        %v980 = vunpack.c.0.s8 %v979
        %v981 = vlaneseq
        %v982 = vshrl.u32 %v981, 7
        %v983 = vsub.s32 %v980, %v982
        %v984 = vrot.slane %v962, %v983
        %v985 = vcombine.high %v984, %v984
        %v987 = vunpack.c.l.s4 1966171168
        %v988 = vunpack.c.0.s8 %v987
        %v989 = vlaneseq
        %v990 = vshrl.u32 %v989, 7
        %v991 = vsub.s32 %v988, %v990
        %v992 = vrot.slane %v984, %v991
        %v994 = vunpack.c.l.s4 1966171168
        %v995 = vunpack.c.0.s8 %v994
        %v996 = vlaneseq
        %v997 = vshrl.u32 %v996, 7
        %v998 = vsub.s32 %v995, %v997
        %v999 = vrot.slane %v985, %v998
        %v1001 = vpack.i.b16 %v992, %v992
        %v1003 = vlaneseq
        %v1004 = vshrl.u32 %v1003, 7
        %v1005 = vsub.s32 0, %v1004
        %v1006 = vrot.slane %v1001, %v1005
        %v1008 = vpack.i.b16 %v999, %v999
        %v1010 = vlaneseq
        %v1011 = vshrl.u32 %v1010, 7
        %v1012 = vsub.s32 0, %v1011
        %v1013 = vrot.slane %v1008, %v1012
        %v1014 = vmul.bf16 %v975, %v1006
        %v1015 = vmul.bf16 %v970, %v1013
        %1016 = vrot.lane.b32.xlu0 %v960, 16
        %v1017 = vpop.permute.xlu0 %1016
        %1018 = vrot.lane.b32.xlu0 %v961, 16
        %v1019 = vpop.permute.xlu0 %1018
        %vm1020 = vcmask 130048
        %v1021 = vsel %vm1020, %v1017, %v1019
        %v1023 = vsel %vm932, 0, %v1017
        %1024 = vrot.lane.b32.xlu0 %v960, 15
        %v1025 = vpop.permute.xlu0 %1024
        %1026 = vrot.lane.b32.xlu0 %v961, 15
        %v1027 = vpop.permute.xlu0 %1026
        %vm1028 = vcmask 121856
        %v1029 = vsel %vm1028, %v1025, %v1027
        %vm1031 = vcmask 121856
        %v1033 = vsel %vm1031, 0, %v1025
        %v1035 = vshrl.u32 %v992, 16
        %v1036 = vpack.i.b16 %v1035, %v1035
        %v1038 = vlaneseq
        %v1039 = vshrl.u32 %v1038, 7
        %v1040 = vsub.s32 0, %v1039
        %v1041 = vrot.slane %v1036, %v1040
        %v1042 = vshrl.u32 %v999, 16
        %v1043 = vpack.i.b16 %v1042, %v1042
        %v1045 = vlaneseq
        %v1046 = vshrl.u32 %v1045, 7
        %v1047 = vsub.s32 0, %v1046
        %v1048 = vrot.slane %v1043, %v1047
        %v1049 = vmul.bf16 %v1033, %v1041
        %v1050 = vmul.bf16 %v1029, %v1048
        %1051 = vrot.lane.b32.xlu0 %v960, 1
        %v1052 = vpop.permute.xlu0 %1051
        %1053 = vrot.lane.b32.xlu0 %v961, 1
        %v1054 = vpop.permute.xlu0 %1053
        %vm1055 = vcmask 7168
        %v1056 = vsel %vm1055, %v1052, %v1054
        %vm1058 = vcmask 7168
        %v1060 = vsel %vm1058, 0, %v1052
        %v1062 = vmul.bf16 %v1060, %v1006
        %v1063 = vmul.bf16 %v1056, %v1013
        %1064 = vrot.lane.b32.xlu0 %v960, 127
        %v1065 = vpop.permute.xlu0 %1064
        %1066 = vrot.lane.b32.xlu0 %v961, 127
        %v1067 = vpop.permute.xlu0 %1066
        %vm1068 = vcmask 1039360
        %v1069 = vsel %vm1068, %v1065, %v1067
        %vm1071 = vcmask 1039360
        %v1073 = vsel %vm1071, %v1067, 0
        %v1075 = vmul.bf16 %v1069, %v1041
        %v1076 = vmul.bf16 %v1073, %v1048
        %1077 = vrot.lane.b32.xlu0 %v960, 113
        %v1078 = vpop.permute.xlu0 %1077
        %1079 = vrot.lane.b32.xlu0 %v961, 113
        %v1080 = vpop.permute.xlu0 %1079
        %vm1081 = vcmask 924672
        %v1082 = vsel %vm1081, %v1078, %v1080
        %vm1084 = vcmask 924672
        %v1086 = vsel %vm1084, %v1080, 0
        %v1088 = vmul.bf16 %v1082, %v1006
        %v1089 = vmul.bf16 %v1086, %v1013
        %1090 = vrot.lane.b32.xlu0 %v960, 112
        %v1091 = vpop.permute.xlu0 %1090
        %1092 = vrot.lane.b32.xlu0 %v961, 112
        %v1093 = vpop.permute.xlu0 %1092
        %vm1094 = vcmask 916480
        %v1095 = vsel %vm1094, %v1091, %v1093
        %v1097 = vsel %vm944, %v1093, 0
        %1098 = vrot.lane.b32.xlu0 %v960, 111
        %v1099 = vpop.permute.xlu0 %1098
        %1100 = vrot.lane.b32.xlu0 %v961, 111
        %v1101 = vpop.permute.xlu0 %1100
        %vm1102 = vcmask 908288
        %v1103 = vsel %vm1102, %v1099, %v1101
        %vm1105 = vcmask 908288
        %v1107 = vsel %vm1105, %v1101, 0
        %v1109 = vmul.bf16 %v1103, %v1041
        %v1110 = vmul.bf16 %v1107, %v1048
        %v1112 = vrot.slane %v1023, 4
        %v1113 = vrot.slane %v1021, 4
        %v1116 = vrot.slane %v1062, 4
        %v1117 = vrot.slane %v1063, 4
        %v1120 = vrot.slane %v1075, 4
        %v1121 = vrot.slane %v1076, 4
        %v1123 = vrot.slane %v1095, 4
        %v1124 = vrot.slane %v1097, 4
        %v1127 = vsel %vm957, %v1014, %v1112
        %v1131 = vsel %vm957, %v1015, %v1113
        %v1135 = vsel %vm957, %v1049, %v1116
        %v1139 = vsel %vm957, %v1050, %v1117
        %v1143 = vsel %vm957, %v960, %v1120
        %v1147 = vsel %vm957, %v961, %v1121
        %v1151 = vsel %vm957, %v1088, %v1123
        %v1155 = vsel %vm957, %v1089, %v1124
        %v1157 = vld [vmem:[%s4] sm:$0x3]
        %vm1158 = vcmask 588800
        %v1160 = vsel %vm1158, %v1157, 0
        %v1163 = vsel %vm957, %v1109, 0
        %v1166 = vsel %vm957, %v1110, 0
        %1168 = vmatprep.subr.bf16.mxu0 0
        %1169 = vmatpush1.bf16.msra.mxu0 0
        %1170 = vmatprep.subr.bf16.mxu0 0
        %1171 = vmatpush1.bf16.msra.mxu0 0
        %1172 = vmatprep.subr.bf16.mxu0 0
        %1173 = vmatpush1.bf16.msra.mxu0 0
        %1174 = vmatprep.subr.bf16.mxu0 %v1166
        %1175 = vmatpush1.bf16.msra.mxu0 %v1163
        %1176 = vmatprep.subr.bf16.mxu0 %v1155
        %1177 = vmatpush1.bf16.msra.mxu0 %v1151
        %1178 = vmatprep.subr.bf16.mxu0 %v1147
        %1179 = vmatpush1.bf16.msra.mxu0 %v1143
        %1180 = vmatprep.subr.bf16.mxu0 %v1139
        %1181 = vmatpush1.bf16.msra.mxu0 %v1135
        %1182 = vmatprep.subr.bf16.mxu0 %v1131
        %1183 = vmatpush1.bf16.msra.mxu0 %v1127
        %1184 = vmatprep.subr.bf16.mxu0 0
        %1185 = vmatpush2.bf16.msra.mxu0 0
        %1186 = vmatprep.subr.bf16.mxu0 0
        %1187 = vmatpush2.bf16.msra.mxu0 0
        %1188 = vmatprep.subr.bf16.mxu0 0
        %1189 = vmatpush2.bf16.msra.mxu0 0
        %1190 = vmatprep.subr.bf16.mxu0 0
        %1191 = vmatpush2.bf16.msra.mxu0 0
        %1192 = vmatprep.subr.bf16.mxu0 0
        %1193 = vmatpush2.bf16.msra.mxu0 0
        %1194 = vmatprep.subr.bf16.mxu0 0
        %1195 = vmatpush2.bf16.msra.mxu0 0
        %1196 = vmatprep.subr.bf16.mxu0 0
        %1197 = vmatpush2.bf16.msra.mxu0 0
        %1198 = vmatprep.subr.bf16.mxu0 0
        %1199 = vmatpush2.bf16.msra.mxu0 0
        %1200 = vmatprep.mubr.bf16.mxu0 0
        %1201 = vmatmul.mubr.bf16.gmra.mxu0 %v1160
        %v1202 = vpop.f32.mrf.mxu0
        %v1203 = vadd.f32 0.0, %v1202
        %v1204 = vpop.f32.mrf.mxu0
        %v1205 = vadd.f32 0.0, %v1204
        %v1206 = vpop.f32.mrf.mxu0
        %v1207 = vpop.f32.mrf.mxu0
        %1208 = vdwg.mxu0
        %v1211 = vcombine.low %v1203, %v1205
        %1213 = vst [vmem:[%s312] sm:$0xff] %v1211
        %v1214 = vsel %vm957, %v1203, 0.0
        %v1215 = vsel %vm957, %v1205, 0.0
        %v1216 = vadd.f32 %v1214, %v1215
        %1217 = vadd.xlane.f32.xlu0 %v1216
        %v1218 = vpop.xlane.xlu0 %1217
        %v1219 = vmul.f32 %v1203, %v1203
        %v1220 = vmul.f32 %v1205, %v1205
        %v1221 = vsel %vm957, %v1219, 0.0
        %v1222 = vsel %vm957, %v1220, 0.0
        %v1223 = vadd.f32 %v1221, %v1222
        %1224 = vadd.xlane.f32.xlu0 %v1223
        %v1225 = vpop.xlane.xlu0 %1224
        %v1226 = vsel %vm1058, %v1218, %v1225
        %vm1227 = vcmask 11264
        %1228 = vst.msk [vmem:[%s327] sm:$0xf] %vm1227, %v1226
        %s1229 = sand.u32 %s169, 1
        %s1230 = scalar_lea.sflag [#allocation4], %s1229
        %s1231 = sand.u32 %s169, 1
        %s1232 = smul.addr %s1231, 8
        %s1233 = scalar_lea.vmem [#allocation5], %s1232
        %p1234 = scmp.lt.s32.totalorder %s25, 1
        %s1235 = scalar_select %p1234, %s25, 1
        %s1236 = smul.addr %s1235, 4
        %s1237 = scalar_lea.vmem %s7, %s1236
        // Predicated region
        $region49: #{tpu_custom_call.1} parent=43 // pred_check
          %p1238 = pneg %p179
        $region50: #{tpu_custom_call.1} parent=43 // pred_check_branch
          %1240 = sbr.rel (%p1238) target = $region52
        $region51: #{tpu_custom_call.1} parent=43 // pred_region
          %s1242 = ssub.s32 128, 128
          %1243 = vsyncadd %s1230, %s1242
          %s1244 = smul.addr %s25, 2
          %s1245 = smul.addr %s1244, 64
          %s1246 = scalar_lea.hbm %s6, %s1245
          %s1248 = sshll.u32 %s1233, 4
          %s1249 = int_to_ptr.vmem [resolvable:$true] %s1248
          %1251 = dma.vmem_to_hbm [thread:$0]  %s1249, 128, %s1246, %s1230
        $region52: #{tpu_custom_call.1} parent=43 // pred_fallthru
          _
        // Predicated region
        $region53: #{tpu_custom_call.1} parent=43 // pred_check
          %p1252 = pneg %p205
        $region54: #{tpu_custom_call.1} parent=43 // pred_check_branch
          %1254 = sbr.rel (%p1252) target = $region56
        $region55: #{tpu_custom_call.1} parent=43 // pred_region
          _
        $region56: #{tpu_custom_call.1} parent=43 // pred_fallthru
          _
      $region44: #{tpu_custom_call.1} parent=5 // pred_fallthru
        _
      %p1255 = scmp.le.s32.totalorder 2, %s20
      // Predicated region
      $region57: #{tpu_custom_call.1} parent=5 // pred_check
        %p1256 = pneg %p1255
      $region58: #{tpu_custom_call.1} parent=5 // pred_check_branch
        %1258 = sbr.rel (%p1256) target = $region60
      $region59: #{tpu_custom_call.1} parent=5 // pred_region
        %s1259 = ssub.s32 %s20, 2
        // Predicated region
        $region61: #{tpu_custom_call.1} parent=59 // pred_check
          %p1260 = pneg %p185
        $region62: #{tpu_custom_call.1} parent=59 // pred_check_branch
          %1262 = sbr.rel (%p1260) target = $region64
        $region63: #{tpu_custom_call.1} parent=59 // pred_region
          %s1263 = sand.u32 %s170, 1
          %s1264 = scalar_lea.sflag [#allocation4], %s1263
          %s1265 = sand.u32 %s170, 1
          %s1266 = smul.addr %s1265, 8
          %s1267 = scalar_lea.vmem [#allocation5], %s1266
          %1268 = dma.done %s1264, 128
        $region64: #{tpu_custom_call.1} parent=59 // pred_fallthru
          _
        // Predicated region
        $region65: #{tpu_custom_call.1} parent=59 // pred_check
          %p1269 = pneg %p211
        $region66: #{tpu_custom_call.1} parent=59 // pred_check_branch
          %1271 = sbr.rel (%p1269) target = $region68
        $region67: #{tpu_custom_call.1} parent=59 // pred_region
          %p1272 = scmp.lt.s32.totalorder %s26, 1
          %s1273 = scalar_select %p1272, %s26, 1
          %s1274 = smul.addr %s1273, 4
          %s1275 = scalar_lea.vmem %s7, %s1274
        $region68: #{tpu_custom_call.1} parent=59 // pred_fallthru
          _
      $region60: #{tpu_custom_call.1} parent=5 // pred_fallthru
        _
    $region6: #{tpu_custom_call.1} parent=1 // loop_footer
      %s24 = sadd.s32 1, %s20
    $region7: #{tpu_custom_call.1} parent=1 // loop_footer_branch
      %19 = sbr.rel target = $region3
    $region8: #{tpu_custom_call.1} parent=1 // loop_exit
      _
    %1276 = vsyncpa [#allocation3], 1
    %s1277 = scalar_lea.sflag [#allocation3], 1
    %1278 = vsyncpa %s1277, 1
    %1279 = vsyncpa [#allocation4], 1
    %s1280 = scalar_lea.sflag [#allocation4], 1
    %1281 = vsyncpa %s1280, 1

</llo_original>
